<compile_context>
chip_gen: v7x
topology: tpu7x:2x2x1
jax: 0.10.0
libtpu: 0.0.40
codegen_flags: <defaults>
</compile_context>

<pallas_src>
import functools

import jax
import jax.numpy as jnp
from jax.experimental import pallas as pl
from jax.experimental.pallas import tpu as pltpu

LN_EPS = 1e-5                    # PyTorch nn.LayerNorm default
_INV_SQRT2 = 0.7071067811865476


def _gelu(x, approx):
    if approx:
        # tanh form -> EUP slot (frees the VALU); small numeric delta vs erf.
        return jax.nn.gelu(x, approximate=True)
    return 0.5 * x * (1.0 + jax.lax.erf(x * _INV_SQRT2))


# ---------------------------------------------------------------------------
# Prelude kernel: per-batch-row work, run ONCE (hoisted out of the node grid).
#   feature_transform (Linear + LayerNorm + GELU) and the text half of the
#   concat-Linear (h @ w2_text + b2), all computed transposed: (H, B).
# ---------------------------------------------------------------------------
def _text_prelude_kernel(tf_ref, w1_ref, w2t_ref, vec_ref, ht_ref, *, approx_gelu):
    b1c = vec_ref[:, 0:1]
    g1c = vec_ref[:, 1:2]
    be1c = vec_ref[:, 2:3]
    b2c = vec_ref[:, 3:4]

    # (H, d_ff) @ (d_ff, B) -> (H, B)
    hT = jnp.dot(w1_ref[...], tf_ref[...], preferred_element_type=jnp.float32) + b1c
    mu = jnp.mean(hT, axis=0, keepdims=True)
    xc = hT - mu
    var = jnp.mean(xc * xc, axis=0, keepdims=True)
    hT = _gelu(xc * jax.lax.rsqrt(var + LN_EPS) * g1c + be1c, approx_gelu)

    # text half of the concat-Linear (+ its bias): (H, H) @ (H, B) -> (H, B)
    htT = jnp.dot(w2t_ref[...], hT, preferred_element_type=jnp.float32) + b2c
    ht_ref[...] = htT.astype(ht_ref.dtype)


# ---------------------------------------------------------------------------
# Node kernel: grid over node tiles only (nodes on lanes -> lane-dense stores).
# Everything batch-row dependent is either precomputed (htT) or rank-1 along
# the node axis.
# ---------------------------------------------------------------------------
def _node_kernel(ne_ref, htc_ref, htr_ref, w2n_ref, w3_ref, vec_ref, b3_ref,
                 out_ref, *, approx_gelu):
    H = ne_ref.shape[0]
    tn = ne_ref.shape[1]
    B = htc_ref.shape[1]

    g2c = vec_ref[:, 0:1]                          # (H, 1)
    be2c = vec_ref[:, 1:2]                         # (H, 1)
    b3c = b3_ref[...]                              # (HO, 1)
    w3T = w3_ref[...]                              # (HO, H)

    ht_col = htc_ref[...]                          # (H, B) f32
    ht_row = htr_ref[...]                          # (B, H) f32

    # node half of the concat-Linear, shared across batch: (H,H)@(H,tn) -> (H,tn)
    hnT = jnp.dot(w2n_ref[...], ne_ref[...], preferred_element_type=jnp.float32)

    # LayerNorm statistics hoisted out of the batch loop (E[x^2]-mu^2 form):
    #   mean(pre_b) = mean_h(hnT) + mean_h(ht_b)
    #   E[pre_b^2]  = E_h[hnT^2] + (2/H) <hnT, ht_b> + E_h[ht_b^2]
    m_n = jnp.mean(hnT, axis=0, keepdims=True)                  # (1, tn)
    s2_n = jnp.mean(hnT * hnT, axis=0, keepdims=True)           # (1, tn)
    mu_t = jnp.mean(ht_col, axis=0, keepdims=True)              # (1, B)
    q_t = jnp.mean(ht_col * ht_col, axis=0, keepdims=True)      # (1, B)
    # cross term for ALL batch rows with one MXU matmul: (B,H)@(H,tn) -> (B,tn)
    cross = jnp.dot(ht_row, hnT, preferred_element_type=jnp.float32) * (2.0 / H)

    def ln_gelu(pre, mu, ex2):
        var = jnp.maximum(ex2 - mu * mu, 0.0)
        inv = jax.lax.rsqrt(var + LN_EPS)
        return _gelu((pre - mu) * inv * g2c + be2c, approx_gelu)

    if B <= 4:
        # Fully unrolled; fuse the B skinny w3 matmuls into one wide one.
        h2_cols = []
        for b in range(B):
            pre = hnT + ht_col[:, b:b + 1]                       # (H, tn)
            mu = m_n + mu_t[:, b:b + 1]                          # (1, tn)
            ex2 = s2_n + cross[b:b + 1, :] + q_t[:, b:b + 1]     # (1, tn)
            h2_cols.append(ln_gelu(pre, mu, ex2))
        h2_all = jnp.concatenate(h2_cols, axis=1)                # (H, B*tn)
        outT = jnp.dot(w3T, h2_all, preferred_element_type=jnp.float32) + b3c
        for b in range(B):
            out_ref[b] = outT[:, b * tn:(b + 1) * tn].astype(out_ref.dtype)
    else:
        # Bounded live ranges for larger batches (static unroll of many
        # (H, tn) temporaries would spill the vreg file).  Masked lane/sublane
        # reductions replace dynamic slicing along the minor (lane) dim.
        ids_col = jax.lax.broadcasted_iota(jnp.int32, (B, 1), 0)
        ids_row = jax.lax.broadcasted_iota(jnp.int32, (1, B), 1)

        def body(b, carry):
            sel_row = ids_row == b                               # (1, B)
            sel_col = ids_col == b                               # (B, 1)
            col = jnp.sum(jnp.where(sel_row, ht_col, 0.0), axis=1, keepdims=True)      # (H,1)
            mu_b = jnp.sum(jnp.where(sel_row, mu_t, 0.0), axis=1, keepdims=True)       # (1,1)
            q_b = jnp.sum(jnp.where(sel_row, q_t, 0.0), axis=1, keepdims=True)         # (1,1)
            cross_b = jnp.sum(jnp.where(sel_col, cross, 0.0), axis=0, keepdims=True)   # (1,tn)
            h2 = ln_gelu(hnT + col, m_n + mu_b, s2_n + cross_b + q_b)                  # (H,tn)
            outT = jnp.dot(w3T, h2, preferred_element_type=jnp.float32) + b3c
            out_ref[b] = outT.astype(out_ref.dtype)
            return carry

        jax.lax.fori_loop(0, B, body, 0, unroll=2)


# ---------------------------------------------------------------------------
# One-time parameter prep (off the hot path).
# ---------------------------------------------------------------------------
def prepare_params(raw_params, *, hidden_dim, weights_dtype=jnp.bfloat16):
    """Split the concat-Linear, transpose for a nodes-on-lanes layout, pack the
    per-feature vectors, pad num_nodes to a multiple of 128 and (optionally)
    cast weights to bf16.  raw_params are in "math" orientation
    (in_features, out_features); a PyTorch state_dict's nn.Linear weights must
    be transposed first."""
    (node_emb, w1, b1, g1, be1, w2, b2, g2, be2, w3, b3) = raw_params
    num_nodes = node_emb.shape[0]
    padded_nodes = -(-num_nodes // 128) * 128

    ne_T = node_emb.T                                            # (H, N)
    if padded_nodes != num_nodes:
        ne_T = jnp.pad(ne_T, ((0, 0), (0, padded_nodes - num_nodes)))

    f32 = jnp.float32
    return dict(
        num_nodes=num_nodes,
        ne_T=ne_T.astype(weights_dtype),                         # (H, Np)
        w1_T=w1.T.astype(weights_dtype),                         # (H, d_ff)
        w2t_T=w2[:hidden_dim].T.astype(weights_dtype),           # (H, H)  text half
        w2n_T=w2[hidden_dim:].T.astype(weights_dtype),           # (H, H)  node half
        w3_T=w3.T.astype(weights_dtype),                         # (HO, H)
        vec1=jnp.stack([b1, g1, be1, b2], axis=1).astype(f32),   # (H, 4)
        vec2=jnp.stack([g2, be2], axis=1).astype(f32),           # (H, 2)
        b3=b3.reshape(-1, 1).astype(f32),                        # (HO, 1)
    )


def _choose_node_tile(padded_nodes):
    # Lane-dense tiles; prefer >= 2 tiles so the "parallel" node axis actually
    # splits across the two TensorCores on v7x.  Sweep upward per generation
    # (>=256 on v5e, 512-1024 on v6e) via the node_tile= override.
    for tile in (512, 256, 128):
        if padded_nodes % tile == 0 and padded_nodes // tile >= 2:
            return tile
    return min(padded_nodes, 128)


def _vmem_limit_bytes(H, B, HO, tile, w_bytes):
    blocks = (2 * H * tile * w_bytes               # node-emb tile (double-buffered)
              + 2 * B * HO * tile * 4              # output tile   (double-buffered)
              + (H * B + B * H + 2 * H) * 4        # htT (both layouts), LN vectors
              + (H * H + HO * H) * w_bytes + HO * 4)   # w2_node, w3, b3 (single-buffered)
    temps = (3 + min(B, 4)) * H * tile * 4 + 2 * B * tile * 4
    est = 2 * (blocks + temps)                     # 2x headroom for compiler temps
    # floor keeps small configs safe, cap keeps it legal on v7x (64 MiB VMEM)
    return int(min(max(est, 16 << 20), 48 << 20))


def textual_output_head(text_features, params, *, horizon, output_dim,
                        approx_gelu=False, node_tile=None, module_layout=True):
    """Forward pass of TextualOutputHead (eval mode).

    Returns (B, horizon, num_nodes, output_dim) when module_layout=True (matches
    the PyTorch module).  With module_layout=False the lane-dense
    (B, horizon, output_dim, num_nodes) kernel layout is returned directly,
    skipping the epilogue transpose (recommended if the consumer can accept it).
    """
    B, _ = text_features.shape
    num_nodes = params["num_nodes"]
    ne_T = params["ne_T"]
    H, padded_nodes = ne_T.shape
    HO = params["w3_T"].shape[0]
    assert HO == horizon * output_dim

    # ---- prelude: per-batch-row work, hoisted out of the node-tile grid ----
    tf_T = text_features.T.astype(jnp.float32)                   # (d_ff, B)
    ht_col = pl.pallas_call(
        functools.partial(_text_prelude_kernel, approx_gelu=approx_gelu),
        out_shape=jax.ShapeDtypeStruct((H, B), jnp.float32),
    )(tf_T, params["w1_T"], params["w2t_T"], params["vec1"])
    ht_row = ht_col.T                                             # tiny (B, H)

    # ---- node-tile kernel ---------------------------------------------------
    if node_tile is None:
        node_tile = _choose_node_tile(padded_nodes)
    assert padded_nodes % node_tile == 0
    n_tiles = padded_nodes // node_tile

    w_bytes = jnp.dtype(ne_T.dtype).itemsize
    vmem_limit = _vmem_limit_bytes(H, B, HO, node_tile, w_bytes)

    def run(single_buffer_constants):
        def const(shape):
            if single_buffer_constants:
                return pl.BlockSpec(shape, lambda n: (0,) * len(shape),
                                    pipeline_mode=pl.Buffered(1))
            return pl.BlockSpec(shape, lambda n: (0,) * len(shape))

        return pl.pallas_call(
            functools.partial(_node_kernel, approx_gelu=approx_gelu),
            out_shape=jax.ShapeDtypeStruct((B, HO, padded_nodes), jnp.float32),
            grid=(n_tiles,),
            in_specs=[
                pl.BlockSpec((H, node_tile), lambda n: (0, n)),   # node-emb tile
                const((H, B)),                                    # htT columns
                const((B, H)),                                    # htT rows
                const((H, H)),                                    # w2_node^T
                const((HO, H)),                                   # w3^T
                const((H, 2)),                                    # [g2, be2]
                const((HO, 1)),                                   # b3
            ],
            out_specs=pl.BlockSpec((B, HO, node_tile), lambda n: (0, 0, n)),
            compiler_params=pltpu.CompilerParams(
                dimension_semantics=("parallel",),
                vmem_limit_bytes=vmem_limit),
        )(ne_T, ht_col, ht_row, params["w2n_T"], params["w3_T"],
          params["vec2"], params["b3"])

    try:
        out = run(True)
    except Exception:
        # pl.Buffered(1) single-buffering of loop-invariant operands is a newer
        # Pallas feature; fall back to default double-buffering if unsupported.
        out = run(False)

    out = out[:, :, :num_nodes]                                   # drop node padding
    preds = out.reshape(B, horizon, output_dim, num_nodes)
    if module_layout:
        # TODO(synk): skip this epilogue transpose if the consumer accepts the
        # lane-dense (B, horizon, output_dim, num_nodes) layout directly.
        preds = preds.transpose(0, 1, 3, 2)
    return preds


# ---------------------------------------------------------------------------
# Pure-JAX transcription of the PyTorch module's forward (eval mode).
# ---------------------------------------------------------------------------
def _reference(text_features, raw_params, *, num_nodes, hidden_dim, horizon,
               output_dim):
    (node_emb, w1, b1, g1, be1, w2, b2, g2, be2, w3, b3) = raw_params

    def ln(x, g, bta):
        mu = jnp.mean(x, axis=-1, keepdims=True)
        xc = x - mu
        var = jnp.mean(xc * xc, axis=-1, keepdims=True)
        return xc * jax.lax.rsqrt(var + LN_EPS) * g + bta

    gelu = lambda x: 0.5 * x * (1.0 + jax.lax.erf(x * _INV_SQRT2))

    h = gelu(ln(text_features @ w1 + b1, g1, be1))                    # (B, H)
    B = h.shape[0]
    t_b = jnp.broadcast_to(h[:, None, :], (B, num_nodes, hidden_dim))
    ne = jnp.broadcast_to(node_emb[None], (B, num_nodes, hidden_dim))
    comb = jnp.concatenate([t_b, ne], axis=-1)                        # (B, N, 2H)
    h2 = gelu(ln(comb @ w2 + b2, g2, be2))                            # (B, N, H)
    out = h2 @ w3 + b3                                                # (B, N, HO)
    return out.reshape(B, num_nodes, horizon, output_dim).transpose(0, 2, 1, 3)


if __name__ == "__main__":
    d_ff = 32
    hidden_dim = 32
    num_nodes = 200          # not a multiple of 128 -> exercises padding + a 2-tile grid
    horizon = 4
    output_dim = 2
    HO = horizon * output_dim

    key = jax.random.PRNGKey(0)
    ks = jax.random.split(key, 12)

    node_emb = jax.random.normal(ks[0], (num_nodes, hidden_dim), jnp.float32)
    w1 = jax.random.normal(ks[1], (d_ff, hidden_dim), jnp.float32) * 0.1
    b1 = jax.random.normal(ks[2], (hidden_dim,), jnp.float32) * 0.1
    g1 = 1.0 + 0.05 * jax.random.normal(ks[3], (hidden_dim,), jnp.float32)
    be1 = 0.05 * jax.random.normal(ks[4], (hidden_dim,), jnp.float32)
    w2 = jax.random.normal(ks[5], (2 * hidden_dim, hidden_dim), jnp.float32) * 0.1
    b2 = jax.random.normal(ks[6], (hidden_dim,), jnp.float32) * 0.1
    g2 = 1.0 + 0.05 * jax.random.normal(ks[7], (hidden_dim,), jnp.float32)
    be2 = 0.05 * jax.random.normal(ks[8], (hidden_dim,), jnp.float32)
    w3 = jax.random.normal(ks[9], (hidden_dim, HO), jnp.float32) * 0.1
    b3 = jax.random.normal(ks[10], (HO,), jnp.float32) * 0.1
    raw = (node_emb, w1, b1, g1, be1, w2, b2, g2, be2, w3, b3)

    # ---- Test 1: fp32 weights, small batch (unrolled path), exact check ----
    B1 = 2
    tf1 = jax.random.normal(ks[11], (B1, d_ff), jnp.float32)
    p32 = prepare_params(raw, hidden_dim=hidden_dim, weights_dtype=jnp.float32)
    preds1 = jax.block_until_ready(
        textual_output_head(tf1, p32, horizon=horizon, output_dim=output_dim))
    assert preds1.shape == (B1, horizon, num_nodes, output_dim), preds1.shape
    ref1 = _reference(tf1, raw, num_nodes=num_nodes, hidden_dim=hidden_dim,
                      horizon=horizon, output_dim=output_dim)
    err1 = float(jnp.max(jnp.abs(preds1 - ref1)))
    assert jnp.allclose(preds1, ref1, atol=1e-4, rtol=1e-4), err1

    # ---- Test 2: bf16 weights, larger batch (fori_loop path) ----------------
    B2 = 6
    tf2 = jax.random.normal(jax.random.PRNGKey(1), (B2, d_ff), jnp.float32)
    pbf = prepare_params(raw, hidden_dim=hidden_dim, weights_dtype=jnp.bfloat16)
    preds2 = jax.block_until_ready(
        textual_output_head(tf2, pbf, horizon=horizon, output_dim=output_dim))
    assert preds2.shape == (B2, horizon, num_nodes, output_dim), preds2.shape

    # same bf16-rounded parameters the kernel consumes -> tight tolerance
    q = lambda a: a.astype(jnp.bfloat16).astype(jnp.float32)
    raw_q = (q(node_emb), q(w1), b1, g1, be1, q(w2), b2, g2, be2, q(w3), b3)
    ref2_q = _reference(tf2, raw_q, num_nodes=num_nodes, hidden_dim=hidden_dim,
                        horizon=horizon, output_dim=output_dim)
    err2 = float(jnp.max(jnp.abs(preds2 - ref2_q)))
    assert jnp.allclose(preds2, ref2_q, atol=1e-3, rtol=1e-3), err2

    # full-precision reference: only the deliberate bf16 weight cast differs
    ref2 = _reference(tf2, raw, num_nodes=num_nodes, hidden_dim=hidden_dim,
                      horizon=horizon, output_dim=output_dim)
    err2_full = float(jnp.max(jnp.abs(preds2 - ref2)))
    assert jnp.allclose(preds2, ref2, atol=5e-2, rtol=5e-2), err2_full

    print("KERNEL_OK")
</pallas_src>

<mosaic_0001>
module attributes {stable_mosaic.version = 11 : i64} {
  func.func @_text_prelude_kernel(%arg0: memref<32x2xf32, #tpu.memory_space<vmem>>, %arg1: memref<32x32xf32, #tpu.memory_space<vmem>>, %arg2: memref<32x32xf32, #tpu.memory_space<vmem>>, %arg3: memref<32x4xf32, #tpu.memory_space<vmem>>, %arg4: memref<32x2xf32, #tpu.memory_space<vmem>>) attributes {dimension_semantics = [], scalar_prefetch = 0 : i64, scratch_operands = 0 : i64, tpu.core_type = #tpu.core_type<tc>} {
    %c0 = arith.constant 0 : index
    %c0_0 = arith.constant 0 : index
    %0 = vector.load %arg3[%c0, %c0_0] : memref<32x4xf32, #tpu.memory_space<vmem>>, vector<32x1xf32>
    %c0_1 = arith.constant 0 : index
    %c1 = arith.constant 1 : index
    %1 = vector.load %arg3[%c0_1, %c1] : memref<32x4xf32, #tpu.memory_space<vmem>>, vector<32x1xf32>
    %c0_2 = arith.constant 0 : index
    %c2 = arith.constant 2 : index
    %2 = vector.load %arg3[%c0_2, %c2] : memref<32x4xf32, #tpu.memory_space<vmem>>, vector<32x1xf32>
    %c0_3 = arith.constant 0 : index
    %c3 = arith.constant 3 : index
    %3 = vector.load %arg3[%c0_3, %c3] : memref<32x4xf32, #tpu.memory_space<vmem>>, vector<32x1xf32>
    %c0_4 = arith.constant 0 : index
    %c0_5 = arith.constant 0 : index
    %4 = vector.load %arg1[%c0_4, %c0_5] : memref<32x32xf32, #tpu.memory_space<vmem>>, vector<32x32xf32>
    %c0_6 = arith.constant 0 : index
    %c0_7 = arith.constant 0 : index
    %5 = vector.load %arg0[%c0_6, %c0_7] : memref<32x2xf32, #tpu.memory_space<vmem>>, vector<32x2xf32>
    %cst = arith.constant dense<0.000000e+00> : vector<32x2xf32>
    %6 = tpu.matmul %4, %5, %cst {dimension_numbers = #tpu.dot_dimension_numbers<[1], [0], [0], [1], [0, 0, 1, 1], [], []>} : vector<32x32xf32>, vector<32x2xf32>, vector<32x2xf32> -> vector<32x2xf32>
    %7 = vector.broadcast %0 : vector<32x1xf32> to vector<32x2xf32>
    %8 = arith.addf %6, %7 : vector<32x2xf32>
    %cst_8 = arith.constant dense<0.000000e+00> : vector<2xf32>
    %9 = vector.multi_reduction <add>, %8, %cst_8 [0] : vector<32x2xf32> to vector<2xf32>
    %10 = vector.shape_cast %9 : vector<2xf32> to vector<1x2xf32>
    %cst_9 = arith.constant 3.200000e+01 : f32
    %11 = vector.broadcast %cst_9 : f32 to vector<1x2xf32>
    %12 = arith.divf %10, %11 : vector<1x2xf32>
    %13 = vector.broadcast %12 : vector<1x2xf32> to vector<32x2xf32>
    %14 = arith.subf %8, %13 : vector<32x2xf32>
    %15 = arith.mulf %14, %14 : vector<32x2xf32>
    %cst_10 = arith.constant dense<0.000000e+00> : vector<2xf32>
    %16 = vector.multi_reduction <add>, %15, %cst_10 [0] : vector<32x2xf32> to vector<2xf32>
    %17 = vector.shape_cast %16 : vector<2xf32> to vector<1x2xf32>
    %cst_11 = arith.constant 3.200000e+01 : f32
    %18 = vector.broadcast %cst_11 : f32 to vector<1x2xf32>
    %19 = arith.divf %17, %18 : vector<1x2xf32>
    %cst_12 = arith.constant 9.99999974E-6 : f32
    %20 = vector.broadcast %cst_12 : f32 to vector<1x2xf32>
    %21 = arith.addf %19, %20 : vector<1x2xf32>
    %22 = math.rsqrt %21 : vector<1x2xf32>
    %23 = vector.broadcast %22 : vector<1x2xf32> to vector<32x2xf32>
    %24 = arith.mulf %14, %23 : vector<32x2xf32>
    %25 = vector.broadcast %1 : vector<32x1xf32> to vector<32x2xf32>
    %26 = arith.mulf %24, %25 : vector<32x2xf32>
    %27 = vector.broadcast %2 : vector<32x1xf32> to vector<32x2xf32>
    %28 = arith.addf %26, %27 : vector<32x2xf32>
    %cst_13 = arith.constant 5.000000e-01 : f32
    %29 = vector.broadcast %cst_13 : f32 to vector<32x2xf32>
    %30 = arith.mulf %29, %28 : vector<32x2xf32>
    %cst_14 = arith.constant 0.707106769 : f32
    %31 = vector.broadcast %cst_14 : f32 to vector<32x2xf32>
    %32 = arith.mulf %28, %31 : vector<32x2xf32>
    %33 = math.erf %32 : vector<32x2xf32>
    %cst_15 = arith.constant 1.000000e+00 : f32
    %34 = vector.broadcast %cst_15 : f32 to vector<32x2xf32>
    %35 = arith.addf %34, %33 : vector<32x2xf32>
    %36 = arith.mulf %30, %35 : vector<32x2xf32>
    %c0_16 = arith.constant 0 : index
    %c0_17 = arith.constant 0 : index
    %37 = vector.load %arg2[%c0_16, %c0_17] : memref<32x32xf32, #tpu.memory_space<vmem>>, vector<32x32xf32>
    %cst_18 = arith.constant dense<0.000000e+00> : vector<32x2xf32>
    %38 = tpu.matmul %37, %36, %cst_18 {dimension_numbers = #tpu.dot_dimension_numbers<[1], [0], [0], [1], [0, 0, 1, 1], [], []>} : vector<32x32xf32>, vector<32x2xf32>, vector<32x2xf32> -> vector<32x2xf32>
    %39 = vector.broadcast %3 : vector<32x1xf32> to vector<32x2xf32>
    %40 = arith.addf %38, %39 : vector<32x2xf32>
    %c0_19 = arith.constant 0 : index
    %c0_20 = arith.constant 0 : index
    %41 = vector.load %arg4[%c0_19, %c0_20] : memref<32x2xf32, #tpu.memory_space<vmem>>, vector<32x2xf32>
    tpu.vector_store %arg4[%c0_19, %c0_20], %40 {strides = array<i32>} : memref<32x2xf32, #tpu.memory_space<vmem>>, vector<32x2xf32>,
    return
  }
}

</mosaic_0001>

<llo_original>
// kernel: tpu_custom_call.1
$region0: #{tpu_custom_call.1}
  #allocation0 [shape = 'u32[]', space=smem, size = 0x4, offset = 0x4, fixed_abs, tag = 'smem constant byte address 0x4 - core index']
  #allocation1 [shape = 'u32[144,128]{1,0:T(1,128)}', space=vmem, size = 0x12000, scoped, tag = 'internal scratch']
  %s0 = inlined_call_operand.vmem [shape: f32[32,2], index: 0, kind: input, shape index: {}]
  %s1 = inlined_call_operand.vmem [shape: f32[32,32], index: 1, kind: input, shape index: {}]
  %s2 = inlined_call_operand.vmem [shape: f32[32,32], index: 2, kind: input, shape index: {}]
  %s3 = inlined_call_operand.vmem [shape: f32[32,4], index: 3, kind: input, shape index: {}]
  %s4 = inlined_call_operand.vmem [shape: f32[32,2], index: 4, kind: output, shape index: {}]
  %s5 = sld [smem:[#allocation0]]
  $region26: #{tpu_custom_call.1} parent=0
    _
  %s7 = ssub.s32 1, %s5
  %s8 = scalar_select 0, %s7, %s5
  // Predicated region
  $region2: #{tpu_custom_call.1} parent=0 // pred_check
    _
  $region3: #{tpu_custom_call.1} parent=0 // pred_check_branch
    %10 = sbr.rel (0) target = $region5
  $region4: #{tpu_custom_call.1} parent=0 // pred_region
    _
  $region5: #{tpu_custom_call.1} parent=0 // pred_fallthru
    _
  // Predicated region
  $region6: #{tpu_custom_call.1} parent=0 // pred_check
    _
  $region7: #{tpu_custom_call.1} parent=0 // pred_check_branch
    %12 = sbr.rel (0) target = $region9
  $region8: #{tpu_custom_call.1} parent=0 // pred_region
    _
  $region9: #{tpu_custom_call.1} parent=0 // pred_fallthru
    _
  // Predicated region
  $region10: #{tpu_custom_call.1} parent=0 // pred_check
    _
  $region11: #{tpu_custom_call.1} parent=0 // pred_check_branch
    %14 = sbr.rel (0) target = $region13
  $region12: #{tpu_custom_call.1} parent=0 // pred_region
    _
  $region13: #{tpu_custom_call.1} parent=0 // pred_fallthru
    _
  // Predicated region
  $region14: #{tpu_custom_call.1} parent=0 // pred_check
    _
  $region15: #{tpu_custom_call.1} parent=0 // pred_check_branch
    %16 = sbr.rel (0) target = $region17
  $region16: #{tpu_custom_call.1} parent=0 // pred_region
    _
  $region17: #{tpu_custom_call.1} parent=0 // pred_fallthru
    _
  %v17 = vld [vmem:[%s3] sm:$0xff]
  %v18 = vld [vmem:[%s3 + $0x8] sm:$0xff]
  %v19 = vld [vmem:[%s3 + $0x10] sm:$0xff]
  %v20 = vld [vmem:[%s3 + $0x18] sm:$0xff]
  %v21 = vld [vmem:[%s1] sm:$0xff]
  %v22 = vld [vmem:[%s1 + $0x8] sm:$0xff]
  %v23 = vld [vmem:[%s1 + $0x10] sm:$0xff]
  %v24 = vld [vmem:[%s1 + $0x18] sm:$0xff]
  %v25 = vld [vmem:[%s0] sm:$0xff]
  %v26 = vld [vmem:[%s0 + $0x8] sm:$0xff]
  %v27 = vld [vmem:[%s0 + $0x10] sm:$0xff]
  %v28 = vld [vmem:[%s0 + $0x18] sm:$0xff]
  %30 = vset.pattern.permute.xlu0 0
  %31 = vperm.xlu0 %30, %v17
  %v32 = vpop.permute.xlu0 %31
  %35 = vset.pattern.permute.xlu0 0
  %36 = vperm.xlu0 %35, %v18
  %v37 = vpop.permute.xlu0 %36
  %40 = vset.pattern.permute.xlu0 0
  %41 = vperm.xlu0 %40, %v19
  %v42 = vpop.permute.xlu0 %41
  %45 = vset.pattern.permute.xlu0 0
  %46 = vperm.xlu0 %45, %v20
  %v47 = vpop.permute.xlu0 %46
  %vm49 = vcmask 261120
  %v51 = vsel %vm49, %v21, 0
  %v54 = vsel %vm49, %v22, 0
  %v57 = vsel %vm49, %v23, 0
  %v60 = vsel %vm49, %v24, 0
  %62 = vmatprep.subr.mxu0 0.0
  %63 = vmatpush1.msra.mxu0 %v25
  %64 = vmatprep.subr.mxu0 0.0
  %65 = vmatpush1.msra.mxu0 %v26
  %66 = vmatprep.subr.mxu0 0.0
  %67 = vmatpush1.msra.mxu0 %v27
  %68 = vmatprep.subr.mxu0 0.0
  %69 = vmatpush1.msra.mxu0 %v28
  %70 = vmatprep.subr.mxu0 0.0
  %71 = vmatpush1.msra.mxu0 0.0
  %72 = vmatprep.subr.mxu0 0.0
  %73 = vmatpush1.msra.mxu0 0.0
  %74 = vmatprep.subr.mxu0 0.0
  %75 = vmatpush1.msra.mxu0 0.0
  %76 = vmatprep.subr.mxu0 0.0
  %77 = vmatpush1.msra.mxu0 0.0
  %78 = vmatprep.subr.mxu0 0.0
  %79 = vmatpush1.msra.mxu0 0.0
  %80 = vmatprep.subr.mxu0 0.0
  %81 = vmatpush1.msra.mxu0 0.0
  %82 = vmatprep.subr.mxu0 0.0
  %83 = vmatpush1.msra.mxu0 0.0
  %84 = vmatprep.subr.mxu0 0.0
  %85 = vmatpush1.msra.mxu0 0.0
  %86 = vmatprep.subr.mxu0 0.0
  %87 = vmatpush1.msra.mxu0 0.0
  %88 = vmatprep.subr.mxu0 0.0
  %89 = vmatpush1.msra.mxu0 0.0
  %90 = vmatprep.subr.mxu0 0.0
  %91 = vmatpush1.msra.mxu0 0.0
  %92 = vmatprep.subr.mxu0 0.0
  %93 = vmatpush1.msra.mxu0 0.0
  %94 = vmatprep.subr.mxu0 0.0
  %95 = vmatpush1.msra.mxu0 0.0
  %96 = vmatprep.subr.mxu0 0.0
  %97 = vmatpush1.msra.mxu0 0.0
  %98 = vmatprep.subr.mxu0 0.0
  %99 = vmatpush1.msra.mxu0 0.0
  %100 = vmatprep.subr.mxu0 0.0
  %101 = vmatpush1.msra.mxu0 0.0
  %102 = vmatprep.subr.mxu0 0.0
  %103 = vmatpush1.msra.mxu0 0.0
  %104 = vmatprep.subr.mxu0 0.0
  %105 = vmatpush1.msra.mxu0 0.0
  %106 = vmatprep.subr.mxu0 0.0
  %107 = vmatpush1.msra.mxu0 0.0
  %108 = vmatprep.subr.mxu0 0.0
  %109 = vmatpush1.msra.mxu0 0.0
  %110 = vmatprep.subr.mxu0 0.0
  %111 = vmatpush1.msra.mxu0 0.0
  %112 = vmatprep.subr.mxu0 0.0
  %113 = vmatpush1.msra.mxu0 0.0
  %114 = vmatprep.subr.mxu0 0.0
  %115 = vmatpush1.msra.mxu0 0.0
  %116 = vmatprep.subr.mxu0 0.0
  %117 = vmatpush1.msra.mxu0 0.0
  %118 = vmatprep.subr.mxu0 0.0
  %119 = vmatpush1.msra.mxu0 0.0
  %120 = vmatprep.subr.mxu0 0.0
  %121 = vmatpush1.msra.mxu0 0.0
  %122 = vmatprep.subr.mxu0 0.0
  %123 = vmatpush1.msra.mxu0 0.0
  %124 = vmatprep.subr.mxu0 0.0
  %125 = vmatpush1.msra.mxu0 0.0
  %126 = vmatprep.mubr.f32.mxu0 0.0
  %127 = vmatmul.mubr.f32.gmra.mrb[0].mxu0 %v51
  %v128 = vpop.f32.mrb[0].mxu0
  %v129 = vadd.f32 %v32, %v128
  %v130 = vpop.f32.mrb[0].mxu0
  %131 = vmatprep.mubr.f32.mxu0 0.0
  %132 = vmatmul.mubr.f32.gmra.mrb[0].mxu0 %v54
  %v133 = vpop.f32.mrb[0].mxu0
  %v134 = vadd.f32 %v37, %v133
  %v135 = vpop.f32.mrb[0].mxu0
  %136 = vmatprep.mubr.f32.mxu0 0.0
  %137 = vmatmul.mubr.f32.gmra.mrb[0].mxu0 %v57
  %v138 = vpop.f32.mrb[0].mxu0
  %v139 = vadd.f32 %v42, %v138
  %v140 = vpop.f32.mrb[0].mxu0
  %141 = vmatprep.mubr.f32.mxu0 0.0
  %142 = vmatmul.mubr.f32.gmra.mrb[0].mxu0 %v60
  %v143 = vpop.f32.mrb[0].mxu0
  %v144 = vadd.f32 %v47, %v143
  %v145 = vpop.f32.mrb[0].mxu0
  %146 = vdwg.mxu0
  %vm147 = vcmask 15360
  %v148 = vsel %vm147, %v129, 0.0
  %v149 = vsel %vm147, %v134, 0.0
  %v150 = vadd.f32 %v148, %v149
  %v151 = vsel %vm147, %v139, 0.0
  %v152 = vadd.f32 %v150, %v151
  %v153 = vsel %vm147, %v144, 0.0
  %v154 = vadd.f32 %v152, %v153
  %v155 = vrot.slane %v154, 4
  %v156 = vadd.f32 %v154, %v155
  %v157 = vrot.slane %v156, 2
  %v158 = vadd.f32 %v156, %v157
  %v159 = vrot.slane %v158, 1
  %v160 = vadd.f32 %v158, %v159
  %v161 = vrcp.pop 32.0
  %v162 = vmul.f32 %v160, %v161
  %v163 = vsub.f32 %v129, %v162
  %v164 = vsub.f32 %v134, %v162
  %v165 = vsub.f32 %v139, %v162
  %v166 = vsub.f32 %v144, %v162
  %v167 = vmul.f32 %v163, %v163
  %v168 = vmul.f32 %v164, %v164
  %v169 = vmul.f32 %v165, %v165
  %v170 = vmul.f32 %v166, %v166
  %v171 = vsel %vm147, %v167, 0.0
  %v172 = vsel %vm147, %v168, 0.0
  %v173 = vadd.f32 %v171, %v172
  %v174 = vsel %vm147, %v169, 0.0
  %v175 = vadd.f32 %v173, %v174
  %v176 = vsel %vm147, %v170, 0.0
  %v177 = vadd.f32 %v175, %v176
  %v178 = vrot.slane %v177, 4
  %v179 = vadd.f32 %v177, %v178
  %v180 = vrot.slane %v179, 2
  %v181 = vadd.f32 %v179, %v180
  %v182 = vrot.slane %v181, 1
  %v183 = vadd.f32 %v181, %v182
  %v184 = vmul.f32 %v183, %v161
  %v185 = vadd.f32 %v184, 1e-05
  %v186 = vrsqrt.pop %v185
  %v187 = vmul.f32 %v163, %v186
  %v188 = vmul.f32 %v164, %v186
  %v189 = vmul.f32 %v165, %v186
  %v190 = vmul.f32 %v166, %v186
  %191 = vset.pattern.permute.xlu0 1
  %192 = vperm.xlu0 %191, %v17
  %v193 = vpop.permute.xlu0 %192
  %195 = vset.pattern.permute.xlu0 1
  %196 = vperm.xlu0 %195, %v18
  %v197 = vpop.permute.xlu0 %196
  %199 = vset.pattern.permute.xlu0 1
  %200 = vperm.xlu0 %199, %v19
  %v201 = vpop.permute.xlu0 %200
  %203 = vset.pattern.permute.xlu0 1
  %204 = vperm.xlu0 %203, %v20
  %v205 = vpop.permute.xlu0 %204
  %v207 = vmul.f32 %v187, %v193
  %v208 = vmul.f32 %v188, %v197
  %v209 = vmul.f32 %v189, %v201
  %v210 = vmul.f32 %v190, %v205
  %211 = vset.pattern.permute.xlu0 2
  %212 = vperm.xlu0 %211, %v17
  %v213 = vpop.permute.xlu0 %212
  %215 = vset.pattern.permute.xlu0 2
  %216 = vperm.xlu0 %215, %v18
  %v217 = vpop.permute.xlu0 %216
  %219 = vset.pattern.permute.xlu0 2
  %220 = vperm.xlu0 %219, %v19
  %v221 = vpop.permute.xlu0 %220
  %223 = vset.pattern.permute.xlu0 2
  %224 = vperm.xlu0 %223, %v20
  %v225 = vpop.permute.xlu0 %224
  %v227 = vadd.f32 %v207, %v213
  %v228 = vadd.f32 %v208, %v217
  %v229 = vadd.f32 %v209, %v221
  %v230 = vadd.f32 %v210, %v225
  %v231 = vmul.f32 %v227, 0.5
  %v232 = vmul.f32 %v228, 0.5
  %v233 = vmul.f32 %v229, 0.5
  %v234 = vmul.f32 %v230, 0.5
  %v235 = vmul.f32 %v227, 0.70710677
  %v236 = vmul.f32 %v228, 0.70710677
  %v237 = vmul.f32 %v229, 0.70710677
  %v238 = vmul.f32 %v230, 0.70710677
  %v239 = verf.f32.pop %v235
  %v240 = verf.f32.pop %v236
  %v241 = verf.f32.pop %v237
  %v242 = verf.f32.pop %v238
  %v243 = vadd.f32 %v239, 1.0
  %v244 = vadd.f32 %v240, 1.0
  %v245 = vadd.f32 %v241, 1.0
  %v246 = vadd.f32 %v242, 1.0
  %v247 = vmul.f32 %v231, %v243
  %v248 = vmul.f32 %v232, %v244
  %v249 = vmul.f32 %v233, %v245
  %v250 = vmul.f32 %v234, %v246
  %v251 = vld [vmem:[%s2] sm:$0xff]
  %v252 = vld [vmem:[%s2 + $0x8] sm:$0xff]
  %v253 = vld [vmem:[%s2 + $0x10] sm:$0xff]
  %v254 = vld [vmem:[%s2 + $0x18] sm:$0xff]
  %255 = vset.pattern.permute.xlu0 3
  %256 = vperm.xlu0 %255, %v17
  %v257 = vpop.permute.xlu0 %256
  %259 = vset.pattern.permute.xlu0 3
  %260 = vperm.xlu0 %259, %v18
  %v261 = vpop.permute.xlu0 %260
  %263 = vset.pattern.permute.xlu0 3
  %264 = vperm.xlu0 %263, %v19
  %v265 = vpop.permute.xlu0 %264
  %267 = vset.pattern.permute.xlu0 3
  %268 = vperm.xlu0 %267, %v20
  %v269 = vpop.permute.xlu0 %268
  %v272 = vsel %vm49, %v251, 0
  %v275 = vsel %vm49, %v252, 0
  %v278 = vsel %vm49, %v253, 0
  %v281 = vsel %vm49, %v254, 0
  %283 = vmatprep.subr.mxu0 0.0
  %284 = vmatpush1.msra.mxu0 %v247
  %285 = vmatprep.subr.mxu0 0.0
  %286 = vmatpush1.msra.mxu0 %v248
  %287 = vmatprep.subr.mxu0 0.0
  %288 = vmatpush1.msra.mxu0 %v249
  %289 = vmatprep.subr.mxu0 0.0
  %290 = vmatpush1.msra.mxu0 %v250
  %291 = vmatprep.subr.mxu0 0.0
  %292 = vmatpush1.msra.mxu0 0.0
  %293 = vmatprep.subr.mxu0 0.0
  %294 = vmatpush1.msra.mxu0 0.0
  %295 = vmatprep.subr.mxu0 0.0
  %296 = vmatpush1.msra.mxu0 0.0
  %297 = vmatprep.subr.mxu0 0.0
  %298 = vmatpush1.msra.mxu0 0.0
  %299 = vmatprep.subr.mxu0 0.0
  %300 = vmatpush1.msra.mxu0 0.0
  %301 = vmatprep.subr.mxu0 0.0
  %302 = vmatpush1.msra.mxu0 0.0
  %303 = vmatprep.subr.mxu0 0.0
  %304 = vmatpush1.msra.mxu0 0.0
  %305 = vmatprep.subr.mxu0 0.0
  %306 = vmatpush1.msra.mxu0 0.0
  %307 = vmatprep.subr.mxu0 0.0
  %308 = vmatpush1.msra.mxu0 0.0
  %309 = vmatprep.subr.mxu0 0.0
  %310 = vmatpush1.msra.mxu0 0.0
  %311 = vmatprep.subr.mxu0 0.0
  %312 = vmatpush1.msra.mxu0 0.0
  %313 = vmatprep.subr.mxu0 0.0
  %314 = vmatpush1.msra.mxu0 0.0
  %315 = vmatprep.subr.mxu0 0.0
  %316 = vmatpush1.msra.mxu0 0.0
  %317 = vmatprep.subr.mxu0 0.0
  %318 = vmatpush1.msra.mxu0 0.0
  %319 = vmatprep.subr.mxu0 0.0
  %320 = vmatpush1.msra.mxu0 0.0
  %321 = vmatprep.subr.mxu0 0.0
  %322 = vmatpush1.msra.mxu0 0.0
  %323 = vmatprep.subr.mxu0 0.0
  %324 = vmatpush1.msra.mxu0 0.0
  %325 = vmatprep.subr.mxu0 0.0
  %326 = vmatpush1.msra.mxu0 0.0
  %327 = vmatprep.subr.mxu0 0.0
  %328 = vmatpush1.msra.mxu0 0.0
  %329 = vmatprep.subr.mxu0 0.0
  %330 = vmatpush1.msra.mxu0 0.0
  %331 = vmatprep.subr.mxu0 0.0
  %332 = vmatpush1.msra.mxu0 0.0
  %333 = vmatprep.subr.mxu0 0.0
  %334 = vmatpush1.msra.mxu0 0.0
  %335 = vmatprep.subr.mxu0 0.0
  %336 = vmatpush1.msra.mxu0 0.0
  %337 = vmatprep.subr.mxu0 0.0
  %338 = vmatpush1.msra.mxu0 0.0
  %339 = vmatprep.subr.mxu0 0.0
  %340 = vmatpush1.msra.mxu0 0.0
  %341 = vmatprep.subr.mxu0 0.0
  %342 = vmatpush1.msra.mxu0 0.0
  %343 = vmatprep.subr.mxu0 0.0
  %344 = vmatpush1.msra.mxu0 0.0
  %345 = vmatprep.subr.mxu0 0.0
  %346 = vmatpush1.msra.mxu0 0.0
  %347 = vmatprep.mubr.f32.mxu0 0.0
  %348 = vmatmul.mubr.f32.gmra.mrb[0].mxu0 %v272
  %v349 = vpop.f32.mrb[0].mxu0
  %v350 = vadd.f32 %v257, %v349
  %v351 = vpop.f32.mrb[0].mxu0
  %352 = vmatprep.mubr.f32.mxu0 0.0
  %353 = vmatmul.mubr.f32.gmra.mrb[0].mxu0 %v275
  %v354 = vpop.f32.mrb[0].mxu0
  %v355 = vadd.f32 %v261, %v354
  %v356 = vpop.f32.mrb[0].mxu0
  %357 = vmatprep.mubr.f32.mxu0 0.0
  %358 = vmatmul.mubr.f32.gmra.mrb[0].mxu0 %v278
  %v359 = vpop.f32.mrb[0].mxu0
  %v360 = vadd.f32 %v265, %v359
  %v361 = vpop.f32.mrb[0].mxu0
  %362 = vmatprep.mubr.f32.mxu0 0.0
  %363 = vmatmul.mubr.f32.gmra.mrb[0].mxu0 %v281
  %v364 = vpop.f32.mrb[0].mxu0
  %v365 = vadd.f32 %v269, %v364
  %v366 = vpop.f32.mrb[0].mxu0
  %367 = vdwg.mxu0
  %368 = vst.msk [vmem:[%s4] sm:$0xff] %vm147, %v350
  %369 = vst.msk [vmem:[%s4 + $0x8] sm:$0xff] %vm147, %v355
  %370 = vst.msk [vmem:[%s4 + $0x10] sm:$0xff] %vm147, %v360
  %371 = vst.msk [vmem:[%s4 + $0x18] sm:$0xff] %vm147, %v365
  // Predicated region
  $region18: #{tpu_custom_call.1} parent=0 // pred_check
    _
  $region19: #{tpu_custom_call.1} parent=0 // pred_check_branch
    %373 = sbr.rel (0) target = $region21
  $region20: #{tpu_custom_call.1} parent=0 // pred_region
    _
  $region21: #{tpu_custom_call.1} parent=0 // pred_fallthru
    _
  // Predicated region
  $region22: #{tpu_custom_call.1} parent=0 // pred_check
    _
  $region23: #{tpu_custom_call.1} parent=0 // pred_check_branch
    %375 = sbr.rel (0) target = $region25
  $region24: #{tpu_custom_call.1} parent=0 // pred_region
    _
  $region25: #{tpu_custom_call.1} parent=0 // pred_fallthru
    _

</llo_original>
